<compile_context>
chip_gen: v6e
topology: v6e:2x2x1
jax: 0.10.0
libtpu: 0.0.40
codegen_flags: <defaults>
</compile_context>

<pallas_src>
import functools
import math

import jax
import jax.numpy as jnp
from jax import lax
from jax.experimental import pallas as pl
from jax.experimental.pallas import tpu as pltpu

SIGMA = 0.5
_TWO_PI = 2.0 * math.pi


def _hash_u32(x, salt):
    """Stateless 32-bit mixer (xxhash/murmur finalizer style). x, salt: uint32."""
    x = x ^ salt
    x = x ^ (x >> 16)
    x = x * jnp.uint32(0x7FEB352D)
    x = x ^ (x >> 15)
    x = x * jnp.uint32(0x846CA68B)
    x = x ^ (x >> 16)
    return x


def _gaussian_noise_kernel(seed_ref, x_ref, o_ref, *, sigma):
    tile_r, lane_w = x_ref.shape
    block = pl.program_id(0)
    seed = seed_ref[0].astype(jnp.uint32)

    # Unique per-element counter across the whole (padded) array -> independent
    # noise per tile and per core.
    row = lax.broadcasted_iota(jnp.int32, (tile_r, lane_w), 0)
    col = lax.broadcasted_iota(jnp.int32, (tile_r, lane_w), 1)
    ctr = (block * (tile_r * lane_w) + row * lane_w + col).astype(jnp.uint32)

    # Two independent uniform streams -> Box-Muller standard normal.
    b1 = _hash_u32(ctr, seed ^ jnp.uint32(0x9E3779B9))
    b2 = _hash_u32(ctr, seed ^ jnp.uint32(0x85EBCA6B))
    u1 = (b1 >> 8).astype(jnp.float32) * jnp.float32(1.0 / (1 << 24))
    u2 = (b2 >> 8).astype(jnp.float32) * jnp.float32(1.0 / (1 << 24))
    u1 = jnp.maximum(u1, jnp.float32(1e-12))  # avoid log(0)

    noise = jnp.sqrt(-2.0 * jnp.log(u1)) * jnp.cos(jnp.float32(_TWO_PI) * u2)

    out = x_ref[...].astype(jnp.float32) + jnp.float32(sigma) * noise
    o_ref[...] = jnp.clip(out, 0.0, 1.0).astype(o_ref.dtype)


def gaussian_noise(img, seed, sigma=SIGMA):
    """Matches GaussianNoise.forward: clamp(img + sigma*randn_like(img), 0, 1),
    computed in f32 and cast back to the original dtype."""
    orig_dtype = img.dtype
    orig_shape = img.shape
    is_float = jnp.issubdtype(orig_dtype, jnp.floating)

    # PyTorch promotes non-float inputs to f32 before adding noise.
    x = img if is_float else img.astype(jnp.float32)
    # Write the original dtype directly from the kernel for float inputs
    # (saves a full extra HBM pass for bf16); int casts happen outside.
    out_dtype = orig_dtype if is_float else jnp.float32

    total = int(x.size)
    # Lane-dense tiling: last dim multiple of 128; ~1 MiB f32 blocks for real
    # workloads (fits comfortably under v5e's 16 MiB / v7x's 32 MiB scoped VMEM
    # with double-buffering), tiny blocks for tiny tensors to limit padding.
    if total >= 512 * 512:
        lane_w, tile_r = 512, 512
    elif total >= 128 * 64:
        lane_w, tile_r = 128, 64
    else:
        lane_w, tile_r = 128, 8

    rows = pl.cdiv(total, lane_w)
    rows_p = pl.cdiv(rows, tile_r) * tile_r
    padded = rows_p * lane_w

    flat = x.reshape(-1)
    if padded != total:
        flat = jnp.pad(flat, (0, padded - total))
    x2d = flat.reshape(rows_p, lane_w)

    seed_arr = jnp.asarray([seed], dtype=jnp.int32)
    kernel = functools.partial(_gaussian_noise_kernel, sigma=float(sigma))

    bytes_in = padded * jnp.dtype(x2d.dtype).itemsize
    bytes_out = padded * jnp.dtype(out_dtype).itemsize

    out2d = pl.pallas_call(
        kernel,
        out_shape=jax.ShapeDtypeStruct((rows_p, lane_w), out_dtype),
        grid_spec=pltpu.PrefetchScalarGridSpec(
            num_scalar_prefetch=1,
            grid=(rows_p // tile_r,),
            in_specs=[pl.BlockSpec((tile_r, lane_w), lambda i, s: (i, 0))],
            out_specs=pl.BlockSpec((tile_r, lane_w), lambda i, s: (i, 0)),
        ),
        compiler_params=pltpu.CompilerParams(
            dimension_semantics=("parallel",),  # blocks are independent (stateless PRNG)
        ),
        cost_estimate=pl.CostEstimate(
            flops=20 * padded,
            transcendentals=3 * padded,
            bytes_accessed=bytes_in + bytes_out,
        ),
    )(seed_arr, x2d)

    out = out2d.reshape(-1)[:total].reshape(orig_shape)
    if out.dtype != orig_dtype:
        # Non-float inputs: cast back (truncation), mirroring torch's .to(dtype).
        out = out.astype(orig_dtype)
    return out


if __name__ == "__main__":
    key = jax.random.PRNGKey(0)
    # Small NCHW image batch in [0, 1].
    x = jax.random.uniform(key, (2, 4, 16, 16), dtype=jnp.float32)

    y = gaussian_noise(x, seed=0, sigma=SIGMA)
    y = jax.block_until_ready(y)

    assert y.shape == x.shape
    assert y.dtype == x.dtype
    assert bool(jnp.all(jnp.isfinite(y)))
    assert bool(jnp.all(y >= 0.0)) and bool(jnp.all(y <= 1.0))
    assert bool(jnp.any(y != x))  # noise actually applied
    print("KERNEL_OK")
</pallas_src>

<mosaic_0001>
module attributes {stable_mosaic.version = 11 : i64} {
  func.func @_gaussian_noise_kernel(%arg0: i32, %arg1: memref<1xi32, #tpu.memory_space<smem>>, %arg2: memref<8x128xf32, #tpu.memory_space<vmem>>, %arg3: memref<8x128xf32, #tpu.memory_space<vmem>>) attributes {dimension_semantics = [#tpu.dimension_semantics<parallel>], iteration_bounds = array<i64: 2>, scalar_prefetch = 1 : i64, scratch_operands = 0 : i64, tpu.core_type = #tpu.core_type<tc>, window_params = [{transform_indices = @transform_0, window_bounds = array<i64: 8, 128>}, {transform_indices = @transform_1, window_bounds = array<i64: 8, 128>}]} {
    %c0 = arith.constant 0 : index
    %0 = memref.load %arg1[%c0] : memref<1xi32, #tpu.memory_space<smem>>
    %1 = tpu.iota {dimensions = array<i32: 0>} : vector<8x128xi32>
    %2 = tpu.iota {dimensions = array<i32: 1>} : vector<8x128xi32>
    %c1024_i32 = arith.constant 1024 : i32
    %3 = arith.muli %arg0, %c1024_i32 : i32
    %c128_i32 = arith.constant 128 : i32
    %4 = vector.broadcast %c128_i32 : i32 to vector<8x128xi32>
    %5 = arith.muli %1, %4 : vector<8x128xi32>
    %6 = vector.broadcast %3 : i32 to vector<8x128xi32>
    %7 = arith.addi %6, %5 : vector<8x128xi32>
    %8 = arith.addi %7, %2 : vector<8x128xi32>
    %c-1640531527_i32 = arith.constant -1640531527 : i32
    %9 = arith.xori %0, %c-1640531527_i32 : i32
    %10 = vector.broadcast %9 : i32 to vector<8x128xi32>
    %11 = arith.xori %8, %10 : vector<8x128xi32>
    %c16_i32 = arith.constant 16 : i32
    %12 = vector.broadcast %c16_i32 : i32 to vector<8x128xi32>
    %13 = arith.shrui %11, %12 : vector<8x128xi32>
    %14 = arith.xori %11, %13 : vector<8x128xi32>
    %c2146121005_i32 = arith.constant 2146121005 : i32
    %15 = vector.broadcast %c2146121005_i32 : i32 to vector<8x128xi32>
    %16 = arith.muli %14, %15 : vector<8x128xi32>
    %c15_i32 = arith.constant 15 : i32
    %17 = vector.broadcast %c15_i32 : i32 to vector<8x128xi32>
    %18 = arith.shrui %16, %17 : vector<8x128xi32>
    %19 = arith.xori %16, %18 : vector<8x128xi32>
    %c-2073254261_i32 = arith.constant -2073254261 : i32
    %20 = vector.broadcast %c-2073254261_i32 : i32 to vector<8x128xi32>
    %21 = arith.muli %19, %20 : vector<8x128xi32>
    %c16_i32_0 = arith.constant 16 : i32
    %22 = vector.broadcast %c16_i32_0 : i32 to vector<8x128xi32>
    %23 = arith.shrui %21, %22 : vector<8x128xi32>
    %24 = arith.xori %21, %23 : vector<8x128xi32>
    %c-2048144789_i32 = arith.constant -2048144789 : i32
    %25 = arith.xori %0, %c-2048144789_i32 : i32
    %26 = vector.broadcast %25 : i32 to vector<8x128xi32>
    %27 = arith.xori %8, %26 : vector<8x128xi32>
    %c16_i32_1 = arith.constant 16 : i32
    %28 = vector.broadcast %c16_i32_1 : i32 to vector<8x128xi32>
    %29 = arith.shrui %27, %28 : vector<8x128xi32>
    %30 = arith.xori %27, %29 : vector<8x128xi32>
    %c2146121005_i32_2 = arith.constant 2146121005 : i32
    %31 = vector.broadcast %c2146121005_i32_2 : i32 to vector<8x128xi32>
    %32 = arith.muli %30, %31 : vector<8x128xi32>
    %c15_i32_3 = arith.constant 15 : i32
    %33 = vector.broadcast %c15_i32_3 : i32 to vector<8x128xi32>
    %34 = arith.shrui %32, %33 : vector<8x128xi32>
    %35 = arith.xori %32, %34 : vector<8x128xi32>
    %c-2073254261_i32_4 = arith.constant -2073254261 : i32
    %36 = vector.broadcast %c-2073254261_i32_4 : i32 to vector<8x128xi32>
    %37 = arith.muli %35, %36 : vector<8x128xi32>
    %c16_i32_5 = arith.constant 16 : i32
    %38 = vector.broadcast %c16_i32_5 : i32 to vector<8x128xi32>
    %39 = arith.shrui %37, %38 : vector<8x128xi32>
    %40 = arith.xori %37, %39 : vector<8x128xi32>
    %c8_i32 = arith.constant 8 : i32
    %41 = vector.broadcast %c8_i32 : i32 to vector<8x128xi32>
    %42 = arith.shrui %24, %41 : vector<8x128xi32>
    %43 = arith.uitofp %42 : vector<8x128xi32> to vector<8x128xf32>
    %cst = arith.constant 5.96046448E-8 : f32
    %44 = vector.broadcast %cst : f32 to vector<8x128xf32>
    %45 = arith.mulf %43, %44 : vector<8x128xf32>
    %c8_i32_6 = arith.constant 8 : i32
    %46 = vector.broadcast %c8_i32_6 : i32 to vector<8x128xi32>
    %47 = arith.shrui %40, %46 : vector<8x128xi32>
    %48 = arith.uitofp %47 : vector<8x128xi32> to vector<8x128xf32>
    %cst_7 = arith.constant 5.96046448E-8 : f32
    %49 = vector.broadcast %cst_7 : f32 to vector<8x128xf32>
    %50 = arith.mulf %48, %49 : vector<8x128xf32>
    %cst_8 = arith.constant 9.99999996E-13 : f32
    %51 = vector.broadcast %cst_8 : f32 to vector<8x128xf32>
    %52 = arith.maximumf %45, %51 : vector<8x128xf32>
    %53 = math.log %52 : vector<8x128xf32>
    %cst_9 = arith.constant -2.000000e+00 : f32
    %54 = vector.broadcast %cst_9 : f32 to vector<8x128xf32>
    %55 = arith.mulf %54, %53 : vector<8x128xf32>
    %56 = math.sqrt %55 : vector<8x128xf32>
    %cst_10 = arith.constant 6.28318548 : f32
    %57 = vector.broadcast %cst_10 : f32 to vector<8x128xf32>
    %58 = arith.mulf %57, %50 : vector<8x128xf32>
    %59 = math.cos %58 : vector<8x128xf32>
    %60 = arith.mulf %56, %59 : vector<8x128xf32>
    %c0_11 = arith.constant 0 : index
    %c0_12 = arith.constant 0 : index
    %61 = vector.load %arg2[%c0_11, %c0_12] : memref<8x128xf32, #tpu.memory_space<vmem>>, vector<8x128xf32>
    %cst_13 = arith.constant 5.000000e-01 : f32
    %62 = vector.broadcast %cst_13 : f32 to vector<8x128xf32>
    %63 = arith.mulf %62, %60 : vector<8x128xf32>
    %64 = arith.addf %61, %63 : vector<8x128xf32>
    %cst_14 = arith.constant 0.000000e+00 : f32
    %cst_15 = arith.constant 1.000000e+00 : f32
    %65 = vector.broadcast %cst_14 : f32 to vector<8x128xf32>
    %66 = arith.maximumf %65, %64 : vector<8x128xf32>
    %67 = vector.broadcast %cst_15 : f32 to vector<8x128xf32>
    %68 = arith.minimumf %67, %66 : vector<8x128xf32>
    %c0_16 = arith.constant 0 : index
    %c0_17 = arith.constant 0 : index
    %69 = vector.load %arg3[%c0_16, %c0_17] : memref<8x128xf32, #tpu.memory_space<vmem>>, vector<8x128xf32>
    tpu.vector_store %arg3[%c0_16, %c0_17], %68 {strides = array<i32>} : memref<8x128xf32, #tpu.memory_space<vmem>>, vector<8x128xf32>,
    return
  }
  func.func @transform_0(%arg0: i32, %arg1: memref<1xi32, #tpu.memory_space<smem>>) -> (i32, i32) {
    %c0_i32 = arith.constant 0 : i32
    %c0_i32_0 = arith.constant 0 : i32
    return %arg0, %c0_i32 : i32, i32
  }
  func.func @transform_1(%arg0: i32, %arg1: memref<1xi32, #tpu.memory_space<smem>>) -> (i32, i32) {
    %c0_i32 = arith.constant 0 : i32
    %c0_i32_0 = arith.constant 0 : i32
    return %arg0, %c0_i32 : i32, i32
  }
}

</mosaic_0001>

<llo_original>
// kernel: tpu_custom_call.1
$region0: #{tpu_custom_call.1}
  #allocation0 [shape = 'u32[]', space=smem, size = 0x4, offset = 0x4, fixed_abs, tag = 'smem constant byte address 0x4 - core index']
  #allocation1 [shape = 'u32[144,128]{1,0:T(1,128)}', space=vmem, size = 0x12000, scoped, tag = 'internal scratch']
  #allocation2 [shape = 's32[1]{0}', space=sflag, size = 0x4, scoped, tag = 'scoped memory for tpu_custom_call.1']
  #allocation3 [shape = 's32[1]{0:T(128)S(6)}', space=smem, size = 0x200, scoped, tag = 'prefetched SMEM operand 0']
  %s0 = inlined_call_operand.<no memory space> [shape: s32[1], index: 0, kind: input, shape index: {}]
  %s1 = inlined_call_operand.hbm [shape: f32[16,128], index: 1, kind: input, shape index: {}]
  %s2 = inlined_call_operand.hbm [shape: f32[16,128], index: 2, kind: output, shape index: {}]
  %s3 = sld [smem:[#allocation0]]
  $region41: #{tpu_custom_call.1} parent=0
    _
  %s5 = ssub.s32 1, %s3
  %s6 = scalar_select 0, %s5, %s3
  %7 = sst [smem:[#allocation3]] %s0
  $region1: #{tpu_custom_call.1} parent=0
    #allocation4 [shape = 'u8[8192]{0}', space=vmem, size = 0x2000, scoped, tag = 'input window, operand 1']
    #allocation5 [shape = 's32[2]{0}', space=sflag, size = 0x8, scoped, tag = 'scoped memory for tpu_custom_call.1']
    #allocation6 [shape = 's32[2]{0}', space=sflag, size = 0x8, scoped, tag = 'scoped memory for tpu_custom_call.1']
    #allocation7 [shape = 'u8[8192]{0}', space=vmem, size = 0x2000, scoped, tag = 'output window, operand 0']
    %8 = vsyncpa [#allocation5], 0
    %s9 = scalar_lea.sflag [#allocation5], 1
    %10 = vsyncpa %s9, 0
    %11 = vsyncpa [#allocation6], 0
    %s12 = scalar_lea.sflag [#allocation6], 1
    %13 = vsyncpa %s12, 0
    loop: start=0, step=1, limit=4
    $region2: #{tpu_custom_call.1} parent=1 // loop_pre_header
      _
    $region3: #{tpu_custom_call.1} parent=1 // loop_header
      %s15 = sphi 0, %s19
      %p16 = scmp.ge.s32.totalorder %s15, 4
      %s25 = sphi 0, %s27
      %s28 = sphi 0, %s25
      %s29 = sphi 0, %s28
      %s45 = sphi 0, %s29
      %s51 = sphi 0, %s53
      %s54 = sphi 0, %s51
      %s55 = sphi 0, %s54
      %s71 = sphi 0, %s55
    $region4: #{tpu_custom_call.1} parent=1 // loop_header_branch
      %18 = sbr.rel (%p16) target = $region8
    $region5: #{tpu_custom_call.1} parent=1 // loop_body
      %s20 = ssub.s32 %s15, 1
      %s21 = ssub.s32 %s15, 2
      %s22 = sadd.s32 %s15, 1
      %s23 = ssub.s32 %s15, %s22
      %p24 = scmp.eq.s32.totalorder %s23, 0
      %s26 = sadd.s32 %s25, 1
      %s27 = scalar_select %p24, %s25, %s26
      %p30 = pneg %p24
      %p31 = scmp.eq.s32.totalorder %s15, 1
      %p32 = por %p30, %p31
      %p33 = scmp.ne.s32.totalorder %s25, %s28
      %p34 = scmp.eq.s32.totalorder %s15, 0
      %p35 = por %p33, %p34
      %p36 = scmp.ne.s32.totalorder %s25, %s28
      %p37 = scmp.eq.s32.totalorder %s20, 1
      %p38 = por %p36, %p37
      %p39 = scmp.ne.s32.totalorder %s28, %s29
      %p40 = scmp.eq.s32.totalorder %s20, 0
      %p41 = por %p39, %p40
      %p42 = scmp.ne.s32.totalorder %s28, %s29
      %p43 = scmp.eq.s32.totalorder %s21, 1
      %p44 = por %p42, %p43
      %p46 = scmp.ne.s32.totalorder %s29, %s45
      %p47 = scmp.eq.s32.totalorder %s21, 0
      %p48 = por %p46, %p47
      %s49 = ssub.s32 %s15, %s22
      %p50 = scmp.eq.s32.totalorder %s49, 0
      %s52 = sadd.s32 %s51, 1
      %s53 = scalar_select %p50, %s51, %s52
      %p56 = pneg %p50
      %p57 = scmp.eq.s32.totalorder %s15, 1
      %p58 = por %p56, %p57
      %p59 = scmp.ne.s32.totalorder %s51, %s54
      %p60 = scmp.eq.s32.totalorder %s15, 0
      %p61 = por %p59, %p60
      %p62 = scmp.ne.s32.totalorder %s51, %s54
      %p63 = scmp.eq.s32.totalorder %s20, 1
      %p64 = por %p62, %p63
      %p65 = scmp.ne.s32.totalorder %s54, %s55
      %p66 = scmp.eq.s32.totalorder %s20, 0
      %p67 = por %p65, %p66
      %p68 = scmp.ne.s32.totalorder %s54, %s55
      %p69 = scmp.eq.s32.totalorder %s21, 1
      %p70 = por %p68, %p69
      %p72 = scmp.ne.s32.totalorder %s55, %s71
      %p73 = scmp.eq.s32.totalorder %s21, 0
      %p74 = por %p72, %p73
      %p75 = scmp.le.s32.totalorder 1, %s15
      %p76 = scmp.lt.s32.totalorder %s15, 3
      %p77 = pnand %p75, %p76
      %p78 = pneg %p77
      // Predicated region
      $region9: #{tpu_custom_call.1} parent=5 // pred_check
        _
      $region10: #{tpu_custom_call.1} parent=5 // pred_check_branch
        %80 = sbr.rel (%p77) target = $region12
      $region11: #{tpu_custom_call.1} parent=5 // pred_region
        %s81 = ssub.s32 %s15, 1
      $region12: #{tpu_custom_call.1} parent=5 // pred_fallthru
        _
      %p82 = scmp.lt.s32.totalorder %s15, 2
      // Predicated region
      $region13: #{tpu_custom_call.1} parent=5 // pred_check
        %p83 = pneg %p82
      $region14: #{tpu_custom_call.1} parent=5 // pred_check_branch
        %85 = sbr.rel (%p83) target = $region16
      $region15: #{tpu_custom_call.1} parent=5 // pred_region
        // Predicated region
        $region17: #{tpu_custom_call.1} parent=15 // pred_check
          %p86 = pneg %p35
        $region18: #{tpu_custom_call.1} parent=15 // pred_check_branch
          %88 = sbr.rel (%p86) target = $region20
        $region19: #{tpu_custom_call.1} parent=15 // pred_region
          %s89 = sand.u32 %s25, 1
          %s90 = scalar_lea.sflag [#allocation5], %s89
          %s91 = sand.u32 %s25, 1
          %s92 = smul.addr %s91, 8
          %s93 = scalar_lea.vmem [#allocation4], %s92
          %s95 = ssub.s32 128, 128
          %96 = vsyncadd %s90, %s95
          %s97 = smul.addr %s15, 128
          %s98 = scalar_lea.hbm %s1, %s97
          %s100 = sshll.u32 %s93, 4
          %s101 = int_to_ptr.vmem [resolvable:$true] %s100
          %103 = dma.hbm_to_vmem [thread:$0]  %s98, 128, %s101, %s90
        $region20: #{tpu_custom_call.1} parent=15 // pred_fallthru
          _
      $region16: #{tpu_custom_call.1} parent=5 // pred_fallthru
        _
      %p104 = scmp.le.s32.totalorder 1, %s15
      %p105 = scmp.lt.s32.totalorder %s15, 3
      %p106 = pnand %p104, %p105
      %p107 = pneg %p106
      // Predicated region
      $region21: #{tpu_custom_call.1} parent=5 // pred_check
        _
      $region22: #{tpu_custom_call.1} parent=5 // pred_check_branch
        %109 = sbr.rel (%p106) target = $region24
      $region23: #{tpu_custom_call.1} parent=5 // pred_region
        %s110 = ssub.s32 %s15, 1
        %s111 = sand.u32 %s28, 1
        %s112 = scalar_lea.sflag [#allocation5], %s111
        %s113 = sand.u32 %s28, 1
        %s114 = smul.addr %s113, 8
        %s115 = scalar_lea.vmem [#allocation4], %s114
        // Predicated region
        $region25: #{tpu_custom_call.1} parent=23 // pred_check
          %p116 = pneg %p41
        $region26: #{tpu_custom_call.1} parent=23 // pred_check_branch
          %118 = sbr.rel (%p116) target = $region28
        $region27: #{tpu_custom_call.1} parent=23 // pred_region
          %119 = dma.done %s112, 128
        $region28: #{tpu_custom_call.1} parent=23 // pred_fallthru
          _
        %s120 = sand.u32 %s28, 1
        %s121 = scalar_lea.sflag [#allocation5], %s120
        %s122 = sand.u32 %s28, 1
        %s123 = smul.addr %s122, 8
        %s124 = scalar_lea.vmem [#allocation4], %s123
        %p125 = pneg %p41
        %p126 = pneg %p38
        %p127 = pneg %p67
        %p128 = pneg %p64
        %s129 = sand.u32 %s54, 1
        %s130 = scalar_lea.sflag [#allocation6], %s129
        %s131 = sand.u32 %s54, 1
        %s132 = smul.addr %s131, 8
        %s133 = scalar_lea.vmem [#allocation7], %s132
        %s134 = sld [smem:[#allocation3]]
        %v135 = vlaneseq
        %v136 = vshrl.u32 %v135, 7
        %v137 = vlaneseq
        %v138 = vand.u32 %v137, 127
        %s139 = smul.u32 %s20, 1024
        %v140 = vmul.u32 %v136, 128
        %v141 = vstv %s139
        %v142 = vadd.s32 %v141, %v140
        %v143 = vadd.s32 %v142, %v138
        %s144 = sxor.u32 %s134, 2654435769
        %v145 = vstv %s144
        %v146 = vxor.u32 %v143, %v145
        %v147 = vshrl.u32 %v146, 16
        %v148 = vxor.u32 %v146, %v147
        %v149 = vmul.u32 %v148, 2146121005
        %v150 = vshrl.u32 %v149, 15
        %v151 = vxor.u32 %v149, %v150
        %v152 = vmul.u32 %v151, 2221713035
        %v153 = vshrl.u32 %v152, 16
        %v154 = vxor.u32 %v152, %v153
        %s155 = sxor.u32 %s134, 2246822507
        %v156 = vstv %s155
        %v157 = vxor.u32 %v143, %v156
        %v158 = vshrl.u32 %v157, 16
        %v159 = vxor.u32 %v157, %v158
        %v160 = vmul.u32 %v159, 2146121005
        %v161 = vshrl.u32 %v160, 15
        %v162 = vxor.u32 %v160, %v161
        %v163 = vmul.u32 %v162, 2221713035
        %v164 = vshrl.u32 %v163, 16
        %v165 = vxor.u32 %v163, %v164
        %v166 = vshrl.u32 %v154, 8
        %v167 = vshrl.u32 %v166, 16
        %v168 = vand.u32 %v166, 65535
        %v169 = vcvt.s32.f32 %v167
        %v170 = vmul.f32 %v169, 65536.0
        %v171 = vcvt.s32.f32 %v168
        %v172 = vadd.f32 %v170, %v171
        %v173 = vmul.f32 %v172, 5.9604645e-08
        %v174 = vshrl.u32 %v165, 8
        %v175 = vshrl.u32 %v174, 16
        %v176 = vand.u32 %v174, 65535
        %v177 = vcvt.s32.f32 %v175
        %v178 = vmul.f32 %v177, 65536.0
        %v179 = vcvt.s32.f32 %v176
        %v180 = vadd.f32 %v178, %v179
        %v181 = vmul.f32 %v180, 5.9604645e-08
        %v182 = vmax.f32 %v173, 1e-12
        %v183 = vlog2.pop %v182
        %v184 = vmul.f32 %v183, 0.6931472
        %v185 = vmul.f32 %v184, -2.0
        %v186 = vrsqrt.pop %v185
        %v187 = vmul.f32 %v185, %v186
        %vm188 = vcmp.eq.f32.partialorder %v185, inf
        %v189 = vsel %vm188, %v185, %v187
        %vm190 = vcmp.eq.f32.partialorder %v185, 0.0
        %v191 = vand.u32 %v185, 2147483648
        %v192 = vsel %vm190, %v191, %v189
        %v193 = vmul.f32 %v181, 6.2831855
        %v194 = vand.u32 2147483647, %v193
        %vm195 = vcmp.le.f32.partialorder %v194, 0.7853982
        %vm196 = vcmp.lt.s32.totalorder %v193, 0
        %v197 = vand.u32 %v193, 2139095040
        %v198 = vshrl.u32 %v197, 23
        %v199 = vsub.s32 %v198, 127
        %v200 = vand.u32 2147483647, %v193
        %v201 = vand.u32 %v200, 8388607
        %v202 = vor.u32 %v201, 8388608
        %v203 = vsub.s32 0, %v202
        %v204 = vadd.s32 %v199, 1
        %vm205 = vcmp.gt.s32.totalorder %v204, 0
        %v206 = vsel %vm205, %v204, 0
        %v207 = vshrl.u32 %v206, 5
        %v208 = vand.u32 %v206, 31
        %v209 = vsub.s32 32, %v208
        %v210 = vshrl.u32 683565275, %v209
        %v211 = vshll.u32 683565275, %v208
        %v212 = vshrl.u32 2475754826, %v209
        %v213 = vor.u32 %v211, %v212
        %v214 = vshll.u32 2475754826, %v208
        %v215 = vshrl.u32 2131351028, %v209
        %v216 = vor.u32 %v214, %v215
        %v217 = vshll.u32 2131351028, %v208
        %v218 = vshrl.u32 2102212464, %v209
        %v219 = vor.u32 %v217, %v218
        %v220 = vshll.u32 2102212464, %v208
        %v221 = vshrl.u32 920167782, %v209
        %v222 = vor.u32 %v220, %v221
        %v223 = vshll.u32 920167782, %v208
        %v224 = vshrl.u32 1326507024, %v209
        %v225 = vor.u32 %v223, %v224
        %vm226 = vcmp.lt.s32.totalorder %v207, 1
        %vm227 = vcmp.lt.s32.totalorder %v207, 2
        %vm228 = vcmp.lt.s32.totalorder %v207, 3
        %vm229 = vcmp.lt.s32.totalorder %v207, 4
        %v230 = vsel %vm226, %v210, %v213
        %v231 = vsel %vm229, %v219, 2102212464
        %v232 = vsel %vm228, %v216, %v231
        %v233 = vsel %vm227, %v230, %v232
        %v234 = vsel %vm226, %v213, %v216
        %v235 = vsel %vm229, %v222, 920167782
        %v236 = vsel %vm228, %v219, %v235
        %v237 = vsel %vm227, %v234, %v236
        %v238 = vsel %vm226, %v216, %v219
        %v239 = vsel %vm229, %v225, 1326507024
        %v240 = vsel %vm228, %v222, %v239
        %v241 = vsel %vm227, %v238, %v240
        %v242 = vshll.u32 %v202, 8
        %v243 = vmul.u32.u64.compose %v242, %v241
        %v244 = vextract.low.u32 %v243
        %v245 = vextract.high.u32 %v243
        %v246 = vmul.u32.u64.compose %v242, %v237
        %v247 = vextract.low.u32 %v246
        %v248 = vextract.high.u32 %v246
        %v249 = vmul.u32 %v242, %v233
        %v250 = vadd.s32 %v245, %v247
        %vm251 = vc.u32 %v245, %v247
        %v252 = vadd.s32 %v248, 1
        %v253 = vsel %vm251, %v252, %v248
        %v254 = vadd.s32 %v249, %v253
        %v255 = vadd.s32 %v254, 536870912
        %v256 = vshrl.u32 %v255, 30
        %v257 = vshll.u32 %v256, 30
        %v258 = vsub.s32 %v254, %v257
        %vm259 = vcmp.lt.s32.totalorder %v258, 0
        %v260 = vsub.s32 0, %v258
        %v261 = vsel %vm259, %v260, %v258
        %v262 = vclz %v261
        %v263 = vsub.s32 %v262, 2
        %vm264 = vcmp.gt.s32.totalorder 0, %v263
        %v265 = vsel %vm264, 0, %v263
        %v266 = vsub.s32 32, %v265
        %v267 = vshll.u32 %v258, %v265
        %v268 = vshrl.u32 %v250, %v266
        %v269 = vor.u32 %v267, %v268
        %v270 = vsub.s32 4294967266, %v265
        %v271 = vadd.s32 %v270, 127
        %v272 = vshll.u32 %v271, 23
        %v273 = vor.u32 4788187, %v272
        %v274 = vand.u32 2147483647, %v273
        %v276 = vcvt.s32.f32 %v269
        %v277 = vmul.f32 %v276, %v274
        %v278 = vxor.u32 %v277, 2147483648
        %v279 = vsel %vm196, %v278, %v277
        %v280 = vsub.s32 4, %v256
        %v281 = vsel %vm196, %v280, %v256
        %v282 = vsel %vm195, %v193, %v279
        %v283 = vsel %vm195, 0, %v281
        %v284 = vcosq.f32.pop %v282
        %v285 = vsinq.f32.pop %v282
        %vm286 = vweird.f32 %v193
        %v287 = vand.u32 %v283, 3
        %vm288 = vcmp.lt.s32.totalorder %v287, 2
        %vm289 = vcmp.eq.s32.totalorder %v287, 0
        %v290 = vxor.u32 %v285, 2147483648
        %v291 = vsel %vm289, %v284, %v290
        %vm292 = vcmp.eq.s32.totalorder %v287, 2
        %v293 = vxor.u32 %v284, 2147483648
        %v294 = vsel %vm292, %v293, %v285
        %v295 = vsel %vm288, %v291, %v294
        %v296 = vsel %vm286, nan, %v295
        %v297 = vmul.f32 %v192, %v296
        %v298 = vld [vmem:[%s115] sm:$0xff]
        %v299 = vmul.f32 %v297, 0.5
        %v300 = vadd.f32 %v298, %v299
        %v301 = vmax.f32 %v300, 0.0
        %v302 = vmin.f32 %v301, 1.0
        %303 = vst [vmem:[%s133] sm:$0xff] %v302
        %s304 = sand.u32 %s54, 1
        %s305 = scalar_lea.sflag [#allocation6], %s304
        %s306 = sand.u32 %s54, 1
        %s307 = smul.addr %s306, 8
        %s308 = scalar_lea.vmem [#allocation7], %s307
        // Predicated region
        $region29: #{tpu_custom_call.1} parent=23 // pred_check
          %p309 = pneg %p64
        $region30: #{tpu_custom_call.1} parent=23 // pred_check_branch
          %311 = sbr.rel (%p309) target = $region32
        $region31: #{tpu_custom_call.1} parent=23 // pred_region
          %s313 = ssub.s32 128, 128
          %314 = vsyncadd %s305, %s313
          %s315 = smul.addr %s20, 128
          %s316 = scalar_lea.hbm %s2, %s315
          %s318 = sshll.u32 %s308, 4
          %s319 = int_to_ptr.vmem [resolvable:$true] %s318
          %321 = dma.vmem_to_hbm [thread:$0]  %s319, 128, %s316, %s305
        $region32: #{tpu_custom_call.1} parent=23 // pred_fallthru
          _
      $region24: #{tpu_custom_call.1} parent=5 // pred_fallthru
        _
      %p322 = scmp.le.s32.totalorder 2, %s15
      // Predicated region
      $region33: #{tpu_custom_call.1} parent=5 // pred_check
        %p323 = pneg %p322
      $region34: #{tpu_custom_call.1} parent=5 // pred_check_branch
        %325 = sbr.rel (%p323) target = $region36
      $region35: #{tpu_custom_call.1} parent=5 // pred_region
        %s326 = ssub.s32 %s15, 2
        // Predicated region
        $region37: #{tpu_custom_call.1} parent=35 // pred_check
          %p327 = pneg %p70
        $region38: #{tpu_custom_call.1} parent=35 // pred_check_branch
          %329 = sbr.rel (%p327) target = $region40
        $region39: #{tpu_custom_call.1} parent=35 // pred_region
          %s330 = sand.u32 %s55, 1
          %s331 = scalar_lea.sflag [#allocation6], %s330
          %s332 = sand.u32 %s55, 1
          %s333 = smul.addr %s332, 8
          %s334 = scalar_lea.vmem [#allocation7], %s333
          %335 = dma.done %s331, 128
        $region40: #{tpu_custom_call.1} parent=35 // pred_fallthru
          _
      $region36: #{tpu_custom_call.1} parent=5 // pred_fallthru
        _
    $region6: #{tpu_custom_call.1} parent=1 // loop_footer
      %s19 = sadd.s32 1, %s15
    $region7: #{tpu_custom_call.1} parent=1 // loop_footer_branch
      %14 = sbr.rel target = $region3
    $region8: #{tpu_custom_call.1} parent=1 // loop_exit
      _
    %336 = vsyncpa [#allocation5], 1
    %s337 = scalar_lea.sflag [#allocation5], 1
    %338 = vsyncpa %s337, 1
    %339 = vsyncpa [#allocation6], 1
    %s340 = scalar_lea.sflag [#allocation6], 1
    %341 = vsyncpa %s340, 1

</llo_original>
